<compile_context>
chip_gen: v7x
topology: tpu7x:2x2x1
jax: 0.10.0
libtpu: 0.0.40
codegen_flags: <defaults>
</compile_context>

<pallas_src>
import functools

import jax
import jax.numpy as jnp
from jax.experimental import pallas as pl
from jax.experimental.pallas import tpu as pltpu

LANES = 128
TILE_BYTES = 2 * 1024 * 1024     # ~2 MiB of input per operand per grid step
ACC_ROWS = 64                    # fixed accumulator rows (64x128 f32 = 32 KiB)
MIN_KERNEL_ROWS = 8              # below this, plain JAX (launch cost dominates)


def _tensorcores_per_chip() -> int:
    """Best-effort TensorCores-per-chip (2 on v7x, 1 on v5e/v6e), capped at 2.

    Falls back to 2: the split is ~free on single-TC chips (at most one extra ~2 MiB
    tile of wasted DMA when the block count is odd) and halves wall time on v7x.
    """
    try:
        info = pltpu.get_tpu_info()
        for name in ("num_cores", "num_tensorcores", "tensorcore_count",
                     "cores_per_chip", "num_cores_per_chip"):
            v = getattr(info, name, None)
            if isinstance(v, int) and v >= 1:
                return max(1, min(v, 2))
    except Exception:
        pass
    try:
        v = getattr(jax.devices()[0], "num_cores", None)
        if isinstance(v, int) and v >= 1:
            return max(1, min(v, 2))
    except Exception:
        pass
    return 2


def _rmse_partial_kernel(o_ref, t_ref, out_ref, acc_ref, *,
                         rows, tile_r, acc_r, blocks_per_core, needs_mask):
    """Per-core partial sum of squared differences.

    Grid is (num_cores, blocks_per_core).  acc_ref is a small (acc_r, 128) f32 VMEM
    accumulator updated with a pure VPU add-tree over the tile's leading axis; the
    single cross-lane reduce to a scalar happens once per core on its last block.
    """
    c = pl.program_id(0)
    i = pl.program_id(1)

    @pl.when(i == 0)
    def _():
        acc_ref[...] = jnp.zeros_like(acc_ref)

    d = o_ref[...].astype(jnp.float32) - t_ref[...].astype(jnp.float32)
    sq = d * d

    def _fold(x):
        # (tile_r, 128) -> (tile_r // acc_r, acc_r, 128) -> (acc_r, 128): pure VPU adds,
        # no per-step cross-lane reduce.
        return x.reshape(-1, acc_r, LANES).sum(axis=0)

    if needs_mask:
        # Only boundary / clamped blocks can touch rows >= `rows`; gate the mask so
        # interior blocks pay nothing.  (int32 row index overflows only past ~2^31 rows
        # ~ 2.7e11 elements — practically irrelevant.)
        logical_block = c * blocks_per_core + i
        is_tail = (logical_block + 1) * tile_r > rows

        @pl.when(jnp.logical_not(is_tail))
        def _():
            acc_ref[...] += _fold(sq)

        @pl.when(is_tail)
        def _():
            row_ids = jax.lax.broadcasted_iota(jnp.int32, (tile_r, LANES), 0)
            global_rows = logical_block * tile_r + row_ids
            acc_ref[...] += _fold(jnp.where(global_rows < rows, sq, 0.0))
    else:
        acc_ref[...] += _fold(sq)

    @pl.when(i == pl.num_programs(1) - 1)
    def _():
        out_ref[0, 0] = jnp.sum(acc_ref[...])   # single final reduce per core


def _sum_sq_diff_pallas(o2d, t2d, rows, tile_rows_cap=None):
    """Sum of (o - t)^2 over the (rows, 128) arrays, accumulated in f32 on TPU."""
    itemsize = jnp.dtype(o2d.dtype).itemsize
    if tile_rows_cap is None:
        # ~TILE_BYTES per operand per step, rounded down to a multiple of ACC_ROWS
        # (f32 -> 4096 rows, bf16/f16 -> 8192 rows).
        cap = max(ACC_ROWS, (TILE_BYTES // (LANES * itemsize)) // ACC_ROWS * ACC_ROWS)
    else:
        cap = tile_rows_cap

    tile_r = rows if rows <= cap else cap
    if tile_r % ACC_ROWS == 0:
        acc_r = ACC_ROWS
    elif tile_r % 8 == 0:
        acc_r = 8
    else:
        acc_r = tile_r             # single small block; accumulator size is irrelevant

    num_blocks = -(-rows // tile_r)
    num_cores = max(1, min(_tensorcores_per_chip(), num_blocks))
    blocks_per_core = -(-num_blocks // num_cores)
    # Mask in-kernel iff the (num_cores * blocks_per_core) grid over-covers `rows`.
    needs_mask = (num_cores * blocks_per_core * tile_r) != rows

    def in_map(c, i):
        blk = c * blocks_per_core + i
        if needs_mask:
            blk = jnp.minimum(blk, num_blocks - 1)   # never request a fully-OOB block
        return (blk, 0)

    kernel = functools.partial(
        _rmse_partial_kernel,
        rows=rows, tile_r=tile_r, acc_r=acc_r,
        blocks_per_core=blocks_per_core, needs_mask=needs_mask,
    )

    # NOTE: pipeline_mode=pl.Buffered(3) on the input specs is a candidate sweep on v7x
    # (short per-step DMAs can expose issue latency); left at default depth-2 here.
    partials = pl.pallas_call(
        kernel,
        out_shape=jax.ShapeDtypeStruct((num_cores, 1), jnp.float32),
        grid_spec=pltpu.PrefetchScalarGridSpec(
            num_scalar_prefetch=0,
            grid=(num_cores, blocks_per_core),
            in_specs=[
                pl.BlockSpec((tile_r, LANES), in_map),
                pl.BlockSpec((tile_r, LANES), in_map),
            ],
            out_specs=pl.BlockSpec((1, 1), lambda c, i: (c, 0),
                                   memory_space=pltpu.SMEM),
            scratch_shapes=[pltpu.VMEM((acc_r, LANES), jnp.float32)],
        ),
        compiler_params=pltpu.CompilerParams(
            dimension_semantics=("parallel", "arbitrary"),
            # Actual use ~8 MiB (2 operands x 2 buffers x ~2 MiB + 32 KiB acc);
            # explicit limit gives headroom and stays under physical VMEM everywhere.
            vmem_limit_bytes=32 * 1024 * 1024,
        ),
    )(o2d, t2d)

    return jnp.sum(partials)


def rmse_pallas(outputs, target, *, tile_rows_cap=None):
    assert outputs.shape == target.shape, "outputs/target must have the same shape"
    n_elem = outputs.size

    # Flatten (free for contiguous inputs); keep native dtype (cast happens in-kernel,
    # halving HBM traffic for 16-bit inputs).
    o_flat = jnp.ravel(outputs)
    t_flat = jnp.ravel(target)

    rows = n_elem // LANES
    aligned = rows * LANES

    # <128-element lane tail: summed in plain JAX (tiny) — no jnp.pad full-array copy.
    if aligned != n_elem:
        d_tail = (o_flat[aligned:].astype(jnp.float32)
                  - t_flat[aligned:].astype(jnp.float32))
        total = jnp.sum(d_tail * d_tail)
    else:
        total = jnp.float32(0.0)

    if rows >= MIN_KERNEL_ROWS:
        if aligned != n_elem:
            # Prefix slice may materialize a copy for non-lane-aligned sizes; the common
            # (aligned) path below is copy-free.
            # TODO(synk): a truly zero-copy unaligned path needs manual DMA
            # (memory_space=pl.ANY) with a partial final chunk.
            o2d = o_flat[:aligned].reshape(rows, LANES)
            t2d = t_flat[:aligned].reshape(rows, LANES)
        else:
            o2d = o_flat.reshape(rows, LANES)
            t2d = t_flat.reshape(rows, LANES)
        total = total + _sum_sq_diff_pallas(o2d, t2d, rows, tile_rows_cap)
    elif rows > 0:
        # KB-scale inputs: pallas_call launch + pipeline prologue dominates; plain JAX.
        d = (o_flat[:aligned].astype(jnp.float32)
             - t_flat[:aligned].astype(jnp.float32))
        total = total + jnp.sum(d * d)

    # Combine and finalize: mean -> sqrt -> *1000.
    return jnp.sqrt(total / jnp.float32(n_elem)) * jnp.float32(1000.0)


if __name__ == "__main__":
    key = jax.random.PRNGKey(0)
    k1, k2, k3, k4, k5, k6, k7, k8 = jax.random.split(key, 8)

    def _ref(o, t):
        d = o.astype(jnp.float32) - t.astype(jnp.float32)
        return jnp.sqrt(jnp.mean(d * d)) * 1000.0

    # Case 1: small NCHW depth-map-like f32 inputs (lane-aligned, single block).
    o1 = jax.random.uniform(k1, (2, 4, 16, 16), dtype=jnp.float32)
    t1 = jax.random.uniform(k2, (2, 4, 16, 16), dtype=jnp.float32)
    r1 = jax.block_until_ready(rmse_pallas(o1, t1))
    assert jnp.allclose(r1, _ref(o1, t1), rtol=1e-5, atol=1e-3), (r1, _ref(o1, t1))

    # Case 2: non-128-aligned element count (lane tail handled in the wrapper).
    o2 = jax.random.uniform(k3, (3, 1, 37, 23), dtype=jnp.float32)
    t2 = jax.random.uniform(k4, (3, 1, 37, 23), dtype=jnp.float32)
    r2 = jax.block_until_ready(rmse_pallas(o2, t2))
    assert jnp.allclose(r2, _ref(o2, t2), rtol=1e-5, atol=1e-3), (r2, _ref(o2, t2))

    # Case 3: bf16 inputs (cast to f32 inside the kernel).
    o3 = jax.random.uniform(k5, (2, 4, 64, 64), dtype=jnp.float32).astype(jnp.bfloat16)
    t3 = jax.random.uniform(k6, (2, 4, 64, 64), dtype=jnp.float32).astype(jnp.bfloat16)
    r3 = jax.block_until_ready(rmse_pallas(o3, t3))
    assert jnp.allclose(r3, _ref(o3, t3), rtol=1e-5, atol=1e-3), (r3, _ref(o3, t3))

    # Case 4: forced tiny tile -> multi-block grid with a partial boundary block,
    # exercising the core split, index clamping and the pl.when-gated tail mask.
    o4 = jax.random.uniform(k7, (40, 128), dtype=jnp.float32)
    t4 = jax.random.uniform(k8, (40, 128), dtype=jnp.float32)
    r4 = jax.block_until_ready(rmse_pallas(o4, t4, tile_rows_cap=16))
    assert jnp.allclose(r4, _ref(o4, t4), rtol=1e-5, atol=1e-3), (r4, _ref(o4, t4))

    print("KERNEL_OK")
</pallas_src>

<mosaic_0001>
module attributes {stable_mosaic.version = 11 : i64} {
  func.func @_rmse_partial_kernel(%arg0: i32, %arg1: i32, %arg2: memref<16x128xf32, #tpu.memory_space<vmem>>, %arg3: memref<16x128xf32, #tpu.memory_space<vmem>>, %arg4: memref<1x1xf32, #tpu.memory_space<smem>>, %arg5: memref<8x128xf32, #tpu.memory_space<vmem>>) attributes {dimension_semantics = [#tpu.dimension_semantics<parallel>, #tpu.dimension_semantics<arbitrary>], iteration_bounds = array<i64: 1, 1>, scalar_prefetch = 0 : i64, scratch_operands = 1 : i64, tpu.core_type = #tpu.core_type<tc>, window_params = [{transform_indices = @transform_0, window_bounds = array<i64: 16, 128>}, {transform_indices = @transform_1, window_bounds = array<i64: 16, 128>}, {transform_indices = @transform_2, window_bounds = array<i64: 1, 1>}]} {
    %c0_i32 = arith.constant 0 : i32
    %0 = arith.cmpi eq, %arg1, %c0_i32 : i32
    %1 = arith.extui %0 : i1 to i32
    %c0_i32_0 = arith.constant 0 : i32
    %2 = arith.cmpi ne, %1, %c0_i32_0 : i32
    scf.if %2 {
      %cst_10 = arith.constant 0.000000e+00 : f32
      %15 = vector.broadcast %cst_10 : f32 to vector<8x128xf32>
      %c0_11 = arith.constant 0 : index
      %c0_12 = arith.constant 0 : index
      %16 = vector.load %arg5[%c0_11, %c0_12] : memref<8x128xf32, #tpu.memory_space<vmem>>, vector<8x128xf32>
      tpu.vector_store %arg5[%c0_11, %c0_12], %15 {strides = array<i32>} : memref<8x128xf32, #tpu.memory_space<vmem>>, vector<8x128xf32>,
    } else {
    }
    %c0 = arith.constant 0 : index
    %c0_1 = arith.constant 0 : index
    %3 = vector.load %arg2[%c0, %c0_1] : memref<16x128xf32, #tpu.memory_space<vmem>>, vector<16x128xf32>
    %c0_2 = arith.constant 0 : index
    %c0_3 = arith.constant 0 : index
    %4 = vector.load %arg3[%c0_2, %c0_3] : memref<16x128xf32, #tpu.memory_space<vmem>>, vector<16x128xf32>
    %5 = arith.subf %3, %4 : vector<16x128xf32>
    %6 = arith.mulf %5, %5 : vector<16x128xf32>
    %c0_4 = arith.constant 0 : index
    %c0_5 = arith.constant 0 : index
    %7 = vector.load %arg5[%c0_4, %c0_5] : memref<8x128xf32, #tpu.memory_space<vmem>>, vector<8x128xf32>
    %8 = vector.shape_cast %6 : vector<16x128xf32> to vector<2x8x128xf32>
    %cst = arith.constant dense<0.000000e+00> : vector<8x128xf32>
    %9 = vector.multi_reduction <add>, %8, %cst [0] : vector<2x8x128xf32> to vector<8x128xf32>
    %10 = arith.addf %7, %9 : vector<8x128xf32>
    %c0_6 = arith.constant 0 : index
    %c0_7 = arith.constant 0 : index
    %11 = vector.load %arg5[%c0_6, %c0_7] : memref<8x128xf32, #tpu.memory_space<vmem>>, vector<8x128xf32>
    tpu.vector_store %arg5[%c0_6, %c0_7], %10 {strides = array<i32>} : memref<8x128xf32, #tpu.memory_space<vmem>>, vector<8x128xf32>,
    %c0_i32_8 = arith.constant 0 : i32
    %12 = arith.cmpi eq, %arg1, %c0_i32_8 : i32
    %13 = arith.extui %12 : i1 to i32
    %c0_i32_9 = arith.constant 0 : i32
    %14 = arith.cmpi ne, %13, %c0_i32_9 : i32
    scf.if %14 {
      %c0_10 = arith.constant 0 : index
      %c0_11 = arith.constant 0 : index
      %15 = vector.load %arg5[%c0_10, %c0_11] : memref<8x128xf32, #tpu.memory_space<vmem>>, vector<8x128xf32>
      %16 = vector.shape_cast %15 : vector<8x128xf32> to vector<1x8x128xf32>
      %cst_12 = arith.constant dense<0.000000e+00> : vector<1xf32>
      %17 = vector.multi_reduction <add>, %16, %cst_12 [1, 2] : vector<1x8x128xf32> to vector<1xf32>
      %18 = vector.shape_cast %17 : vector<1xf32> to vector<1x1x1xf32>
      %19 = vector.extract %18[0, 0, 0] : f32 from vector<1x1x1xf32>
      %c0_13 = arith.constant 0 : index
      %c0_14 = arith.constant 0 : index
      %20 = memref.load %arg4[%c0_13, %c0_14] : memref<1x1xf32, #tpu.memory_space<smem>>
      memref.store %19, %arg4[%c0_13, %c0_14] : memref<1x1xf32, #tpu.memory_space<smem>>
    } else {
    }
    return
  }
  func.func @transform_0(%arg0: i32, %arg1: i32) -> (i32, i32) {
    %c1_i32 = arith.constant 1 : i32
    %0 = arith.muli %arg0, %c1_i32 : i32
    %1 = arith.addi %0, %arg1 : i32
    %c0_i32 = arith.constant 0 : i32
    %c0_i32_0 = arith.constant 0 : i32
    return %1, %c0_i32 : i32, i32
  }
  func.func @transform_1(%arg0: i32, %arg1: i32) -> (i32, i32) {
    %c1_i32 = arith.constant 1 : i32
    %0 = arith.muli %arg0, %c1_i32 : i32
    %1 = arith.addi %0, %arg1 : i32
    %c0_i32 = arith.constant 0 : i32
    %c0_i32_0 = arith.constant 0 : i32
    return %1, %c0_i32 : i32, i32
  }
  func.func @transform_2(%arg0: i32, %arg1: i32) -> (i32, i32) {
    %c0_i32 = arith.constant 0 : i32
    %c0_i32_0 = arith.constant 0 : i32
    return %arg0, %c0_i32 : i32, i32
  }
}

</mosaic_0001>

<llo_original>
// kernel: tpu_custom_call.1
$region0: #{tpu_custom_call.1}
  #allocation0 [shape = 'u32[]', space=smem, size = 0x4, offset = 0x4, fixed_abs, tag = 'smem constant byte address 0x4 - core index']
  #allocation1 [shape = 'u32[144,128]{1,0:T(1,128)}', space=vmem, size = 0x12000, scoped, tag = 'internal scratch']
  #allocation2 [shape = 'f32[8,128]{1,0:T(8,128)}', space=vmem, size = 0x1000, scoped, tag = 'scratch operand']
  %s0 = inlined_call_operand.hbm [shape: f32[16,128], index: 0, kind: input, shape index: {}]
  %s1 = inlined_call_operand.hbm [shape: f32[16,128], index: 1, kind: input, shape index: {}]
  %s2 = inlined_call_operand.hbm [shape: f32[1,1], index: 2, kind: output, shape index: {}]
  %s3 = sld [smem:[#allocation0]]
  $region34: #{tpu_custom_call.1} parent=0
    _
  %s5 = ssub.s32 1, %s3
  %s6 = scalar_select 0, %s5, %s3
  $region1: #{tpu_custom_call.1} parent=0
    #allocation3 [shape = 'u8[8192]{0}', space=vmem, size = 0x2000, scoped, tag = 'input window, operand 0, single buffered']
    #allocation4 [shape = 's32[1]{0}', space=sflag, size = 0x4, scoped, tag = 'scoped memory for tpu_custom_call.1']
    #allocation5 [shape = 's32[1]{0}', space=sflag, size = 0x4, scoped, tag = 'scoped memory for tpu_custom_call.1']
    #allocation6 [shape = 'u8[8192]{0}', space=vmem, size = 0x2000, scoped, tag = 'input window, operand 1, single buffered']
    #allocation7 [shape = 's32[1]{0}', space=sflag, size = 0x4, scoped, tag = 'scoped memory for tpu_custom_call.1']
    #allocation8 [shape = 'u8[512]{0}', space=smem, size = 0x200, scoped, tag = 'output window, operand 0, single buffered']
    %7 = vsyncpa [#allocation4], 0
    %8 = vsyncpa [#allocation7], 0
    %9 = vsyncpa [#allocation5], 0
    // Predicated region
    $region2: #{tpu_custom_call.1} parent=1 // pred_check
      _
    $region3: #{tpu_custom_call.1} parent=1 // pred_check_branch
      %11 = sbr.rel (0) target = $region5
    $region4: #{tpu_custom_call.1} parent=1 // pred_region
      %s12 = sadd.s32 0, 0
      %s13 = smul.u32 2, %s12
      %s15 = ssub.s32 256, 256
      %16 = vsyncadd [#allocation4], %s15
      %s17 = smul.addr %s13, 128
      %s18 = scalar_lea.hbm %s0, %s17
      %s19 = sshll.u32 [#allocation3], 4
      %s20 = int_to_ptr.vmem [resolvable:$true] %s19
      %25 = dma.hbm_to_vmem [thread:$0]  %s18, 256, %s20, [#allocation4], 128, 128, 8
    $region5: #{tpu_custom_call.1} parent=1 // pred_fallthru
      _
    // Predicated region
    $region6: #{tpu_custom_call.1} parent=1 // pred_check
      _
    $region7: #{tpu_custom_call.1} parent=1 // pred_check_branch
      %27 = sbr.rel (0) target = $region9
    $region8: #{tpu_custom_call.1} parent=1 // pred_region
      %s28 = sadd.s32 0, 0
      %s29 = smul.u32 2, %s28
      %s31 = ssub.s32 256, 256
      %32 = vsyncadd [#allocation7], %s31
      %s33 = smul.addr %s29, 128
      %s34 = scalar_lea.hbm %s1, %s33
      %s35 = sshll.u32 [#allocation6], 4
      %s36 = int_to_ptr.vmem [resolvable:$true] %s35
      %41 = dma.hbm_to_vmem [thread:$0]  %s34, 256, %s36, [#allocation7], 128, 128, 8
    $region9: #{tpu_custom_call.1} parent=1 // pred_fallthru
      _
    // Predicated region
    $region10: #{tpu_custom_call.1} parent=1 // pred_check
      _
    $region11: #{tpu_custom_call.1} parent=1 // pred_check_branch
      %43 = sbr.rel (0) target = $region13
    $region12: #{tpu_custom_call.1} parent=1 // pred_region
      %44 = dma.done [#allocation4], 256
    $region13: #{tpu_custom_call.1} parent=1 // pred_fallthru
      _
    // Predicated region
    $region14: #{tpu_custom_call.1} parent=1 // pred_check
      _
    $region15: #{tpu_custom_call.1} parent=1 // pred_check_branch
      %46 = sbr.rel (0) target = $region17
    $region16: #{tpu_custom_call.1} parent=1 // pred_region
      %47 = dma.done [#allocation7], 256
    $region17: #{tpu_custom_call.1} parent=1 // pred_fallthru
      _
    %s48 = sadd.s32 0, 0
    %s49 = smul.u32 2, %s48
    %s50 = sadd.s32 0, 0
    %s51 = smul.u32 2, %s50
    %p52 = scmp.eq.s32.totalorder 0, 0
    // Predicated region
    $region18: #{tpu_custom_call.1} parent=1 // pred_check
      %p53 = pneg %p52
    $region19: #{tpu_custom_call.1} parent=1 // pred_check_branch
      %55 = sbr.rel (%p53) target = $region21
    $region20: #{tpu_custom_call.1} parent=1 // pred_region
      %56 = vst [vmem:[#allocation2] sm:$0xff] 0.0
    $region21: #{tpu_custom_call.1} parent=1 // pred_fallthru
      _
    %v57 = vld [vmem:[#allocation3] sm:$0xff]
    %v58 = vld [vmem:[#allocation3 + $0x8] sm:$0xff]
    %v59 = vld [vmem:[#allocation6] sm:$0xff]
    %v60 = vld [vmem:[#allocation6 + $0x8] sm:$0xff]
    %v61 = vsub.f32 %v57, %v59
    %v62 = vsub.f32 %v58, %v60
    %v63 = vmul.f32 %v61, %v61
    %v64 = vmul.f32 %v62, %v62
    %v65 = vld [vmem:[#allocation2] sm:$0xff]
    %v66 = vadd.f32 %v63, %v64
    %v67 = vadd.f32 %v65, %v66
    %68 = vst [vmem:[#allocation2] sm:$0xff] %v67
    // Predicated region
    $region22: #{tpu_custom_call.1} parent=1 // pred_check
      %p69 = pneg %p52
    $region23: #{tpu_custom_call.1} parent=1 // pred_check_branch
      %71 = sbr.rel (%p69) target = $region25
    $region24: #{tpu_custom_call.1} parent=1 // pred_region
      %v72 = vld [vmem:[#allocation2] sm:$0xff]
      %73 = vadd.xlane.f32.xlu0 %v72
      %v74 = vpop.xlane.xlu0 %73
      %v75 = vrot.slane %v74, 4
      %v76 = vadd.f32 %v74, %v75
      %v77 = vrot.slane %v76, 2
      %v78 = vadd.f32 %v76, %v77
      %v79 = vrot.slane %v78, 1
      %v80 = vadd.f32 %v78, %v79
      %s81 = vtos %v80
      %s82 = scalar_lea.smem [#allocation8], 0
      %83 = sst [smem:[%s82]] %s81
    $region25: #{tpu_custom_call.1} parent=1 // pred_fallthru
      _
    // Predicated region
    $region26: #{tpu_custom_call.1} parent=1 // pred_check
      _
    $region27: #{tpu_custom_call.1} parent=1 // pred_check_branch
      %85 = sbr.rel (0) target = $region29
    $region28: #{tpu_custom_call.1} parent=1 // pred_region
      %s87 = ssub.s32 16, 16
      %88 = vsyncadd [#allocation5], %s87
      %91 = dma.smem_to_hbm [#allocation8], 16, %s2, [#allocation5]
    $region29: #{tpu_custom_call.1} parent=1 // pred_fallthru
      _
    // Predicated region
    $region30: #{tpu_custom_call.1} parent=1 // pred_check
      _
    $region31: #{tpu_custom_call.1} parent=1 // pred_check_branch
      %93 = sbr.rel (0) target = $region33
    $region32: #{tpu_custom_call.1} parent=1 // pred_region
      %94 = dma.done [#allocation5], 16
    $region33: #{tpu_custom_call.1} parent=1 // pred_fallthru
      _
    %95 = sfence
    %96 = vsyncpa [#allocation4], 1
    %97 = vsyncpa [#allocation7], 1
    %98 = vsyncpa [#allocation5], 1

</llo_original>
